<compile_context>
chip_gen: v5e
topology: v5e:2x2
jax: 0.10.0
libtpu: 0.0.40
codegen_flags: <defaults>
</compile_context>

<pallas_src>
import functools

import numpy as np
import jax
import jax.numpy as jnp
from jax import lax
from jax.experimental import pallas as pl
from jax.experimental.pallas import tpu as pltpu


_LANE = 128
_SUBLANE = 8
# Per-tile-buffer budget: with input + output double-buffered (plus the random
# bits operand in 'random' mode) at most ~6 tile buffers are live, so 2 MiB
# tiles stay well under v5e's 16 MiB default scoped VMEM and v7x's 64 MiB
# physical VMEM.
_TILE_BYTES = 2 * 1024 * 1024
_VMEM_LIMIT_BYTES = 32 * 1024 * 1024


def _compiler_params():
    # Row grid is embarrassingly parallel -> v7x shards tiles across its two
    # TensorCores; harmless no-op on v5e/v6e.  Raise scoped VMEM above v5e's
    # 16 MiB default so double-buffered tiles never spill.
    return pltpu.CompilerParams(
        dimension_semantics=("parallel",),
        vmem_limit_bytes=_VMEM_LIMIT_BYTES,
    )


def _pick_tile_rows(rows, cols, dtype):
    """Largest row tile that keeps one tile <= ~2 MiB and satisfies the TPU
    (8, 128) blocking rule (multiple of 8, or the full row extent)."""
    bytes_per_row = max(1, cols * jnp.dtype(dtype).itemsize)
    cap = max(_SUBLANE, _TILE_BYTES // bytes_per_row)
    if rows <= cap:
        return rows                              # full extent: always legal
    return max(_SUBLANE, (int(cap) // _SUBLANE) * _SUBLANE)


def _maybe_flatten(x):
    """Lane-dense view for purely elementwise modes: reshape (rows, cols) to
    (n // 128, 128) when cols is not lane-aligned so stores are full-width
    unmasked vst instead of masked partial stores."""
    rows, cols = x.shape
    n = rows * cols
    if cols % _LANE != 0 and n % _LANE == 0:
        return x.reshape(n // _LANE, _LANE), True
    return x, False


# ----------------------------------------------------------------------------
# Kernels
# ----------------------------------------------------------------------------
def _row_mask_kernel(x_ref, o_ref, *, tile_rows, rows_to_zero, mode, scale):
    """'row' / 'row_end': zero whole rows by global row index.

    Fully-kept / fully-dropped tiles are gated with pl.when (plain scaled copy
    or zero fill); only the boundary tile builds a (rows, 1) sublane iota that
    broadcasts over the lane axis.
    """
    pid = pl.program_id(0)
    start = pid * tile_rows
    end = start + tile_rows
    if mode == "row":            # drop global rows [0, rows_to_zero)
        full_keep = start >= rows_to_zero
        full_drop = end <= rows_to_zero
    else:                        # 'row_end': drop global rows [rows_to_zero, rows)
        full_keep = end <= rows_to_zero
        full_drop = start >= rows_to_zero

    @pl.when(full_keep)
    def _():
        o_ref[...] = (x_ref[...] * scale).astype(o_ref.dtype)

    @pl.when(full_drop)
    def _():
        o_ref[...] = jnp.zeros(o_ref.shape, o_ref.dtype)

    @pl.when(jnp.logical_not(jnp.logical_or(full_keep, full_drop)))
    def _():
        row_ids = start + lax.broadcasted_iota(jnp.int32, (tile_rows, 1), 0)
        if mode == "row":
            keep = row_ids >= rows_to_zero
        else:
            keep = row_ids < rows_to_zero
        o_ref[...] = (jnp.where(keep, x_ref[...], 0) * scale).astype(o_ref.dtype)


def _global_thresh_kernel(thresh_ref, x_ref, o_ref, *, scale):
    """'max_activation': drop everything >= the k-th largest value (scalar threshold in SMEM)."""
    x = x_ref[...]
    thresh = thresh_ref[0, 0]
    o_ref[...] = (jnp.where(x < thresh, x, 0) * scale).astype(o_ref.dtype)


def _row_thresh_kernel(x_ref, thresh_ref, o_ref, *, scale):
    """'alt_max_activation': per-row threshold, drop the per-row smallest values."""
    x = x_ref[...]
    thr = thresh_ref[...]                    # (tile_rows, 1), broadcasts over cols
    o_ref[...] = (jnp.where(x >= thr, x, 0) * scale).astype(o_ref.dtype)


def _random_kernel(bits_ref, x_ref, o_ref, *, thresh_bits, scale):
    """'random' / 'debug': Bernoulli mask via integer compare against raw uint32 bits.

    P(bits >= floor(p * 2^32)) == 1 - p, matching `np.random.rand(...) > p`.
    """
    keep = bits_ref[...] >= thresh_bits
    o_ref[...] = (jnp.where(keep, x_ref[...], 0) * scale).astype(o_ref.dtype)


# ----------------------------------------------------------------------------
# Wrapper (DeterministicDropout.forward, training=True path)
# ----------------------------------------------------------------------------
def deterministic_dropout(x, mode, p=0.5, seed=0, training=True):
    if not training:
        return x
    assert x.ndim == 2, "CustomDropout operates on 2-D (rows, cols) inputs"
    rows, cols = x.shape
    scale = 1.0 / (1.0 - p)

    def _block(tr, c):
        return pl.BlockSpec((tr, c), lambda i: (i, 0))

    if mode in ("row", "row_end"):
        rows_to_zero = int(np.floor(rows * p))
        tr = _pick_tile_rows(rows, cols, x.dtype)
        kernel = functools.partial(
            _row_mask_kernel, tile_rows=tr, rows_to_zero=rows_to_zero,
            mode=mode, scale=scale)
        return pl.pallas_call(
            kernel,
            out_shape=jax.ShapeDtypeStruct((rows, cols), x.dtype),
            grid=(pl.cdiv(rows, tr),),
            in_specs=[_block(tr, cols)],
            out_specs=_block(tr, cols),
            compiler_params=_compiler_params(),
        )(x)

    if mode == "max_activation":
        # TODO(synk): global argsort has no clean Pallas equivalent; only the
        # k-th largest value is needed, so use lax.top_k (not a full sort).
        k = int(np.floor(rows * cols * p))
        if k == 0:
            thresh = jnp.full((1, 1), jnp.inf, jnp.float32)
        else:
            topk_vals, _ = lax.top_k(x.reshape(-1).astype(jnp.float32), k)
            thresh = topk_vals[k - 1].reshape(1, 1)
        xw, flat = _maybe_flatten(x)            # lane-dense elementwise view
        r2, c2 = xw.shape
        tr = _pick_tile_rows(r2, c2, xw.dtype)
        kernel = functools.partial(_global_thresh_kernel, scale=scale)
        out = pl.pallas_call(
            kernel,
            out_shape=jax.ShapeDtypeStruct((r2, c2), x.dtype),
            grid=(pl.cdiv(r2, tr),),
            in_specs=[pl.BlockSpec(memory_space=pltpu.MemorySpace.SMEM),
                      _block(tr, c2)],
            out_specs=_block(tr, c2),
            compiler_params=_compiler_params(),
        )(thresh, xw)
        return out.reshape(rows, cols) if flat else out

    if mode == "alt_max_activation":
        # Row i gets budget_i = clip(nodes_to_drop - i*per_row, 0, per_row)
        # smallest-value drops (exactly reproduces the sequential numpy loop).
        nodes_to_drop = int(np.floor(rows * cols * p))
        per_row = int(np.floor(cols * p))
        budgets = np.clip(nodes_to_drop - np.arange(rows) * per_row,
                          0, per_row).astype(np.int32)
        # TODO(synk): per-row argsort done with lax.top_k glue (no Pallas sort);
        # only the smallest (per_row + 1) values per row are needed.
        kk = min(per_row + 1, cols)
        smallest = -lax.top_k(-x.astype(jnp.float32), kk)[0]    # ascending smallest
        padded = jnp.concatenate(
            [smallest, jnp.full((rows, 1), jnp.inf, jnp.float32)], axis=1)
        thresh = jnp.take_along_axis(
            padded, jnp.asarray(np.minimum(budgets, kk))[:, None], axis=1)  # (rows, 1)

        tr = _pick_tile_rows(rows, cols, x.dtype)
        kernel = functools.partial(_row_thresh_kernel, scale=scale)
        return pl.pallas_call(
            kernel,
            out_shape=jax.ShapeDtypeStruct((rows, cols), x.dtype),
            grid=(pl.cdiv(rows, tr),),
            in_specs=[_block(tr, cols), _block(tr, 1)],
            out_specs=_block(tr, cols),
            compiler_params=_compiler_params(),
        )(x, thresh)

    if mode in ("random", "debug"):
        # TODO(synk): pltpu.prng_seed / prng_random_bits have no interpret/CPU
        # lowering, so the Bernoulli bits are generated with jax.random outside
        # the kernel; the kernel does a pure integer-threshold compare.
        thresh_bits = np.uint32(min(int(round(p * 2.0 ** 32)), 2 ** 32 - 1))
        xw, flat = _maybe_flatten(x)            # lane-dense elementwise view
        r2, c2 = xw.shape
        bits = jax.random.bits(jax.random.PRNGKey(seed), (r2, c2), dtype=jnp.uint32)
        tr = _pick_tile_rows(r2, c2, xw.dtype)
        kernel = functools.partial(_random_kernel, thresh_bits=thresh_bits, scale=scale)
        out = pl.pallas_call(
            kernel,
            out_shape=jax.ShapeDtypeStruct((r2, c2), x.dtype),
            grid=(pl.cdiv(r2, tr),),
            in_specs=[_block(tr, c2), _block(tr, c2)],
            out_specs=_block(tr, c2),
            compiler_params=_compiler_params(),
        )(bits, xw)
        return out.reshape(rows, cols) if flat else out

    raise ValueError(f"unknown mode {mode!r}")


# ----------------------------------------------------------------------------
# Pure-numpy reference (direct port of CustomDropout.forward) for verification
# ----------------------------------------------------------------------------
def _ref_dropout(x, mode, p):
    x = np.asarray(x, dtype=np.float64)
    rows, cols = x.shape
    mask = np.ones((rows, cols))
    if mode in ("row", "row_end"):
        rz = int(np.floor(rows * p))
        if mode == "row":
            mask[:rz] = 0
        else:
            mask[rz:] = 0
    elif mode == "max_activation":
        k = int(np.floor(rows * cols * p))
        drop_indices = np.dstack(
            np.unravel_index(np.argsort(x.ravel()), (rows, cols)))[0][::-1]
        for i in range(k):
            r, c = drop_indices[i]
            mask[r, c] = 0
    elif mode == "alt_max_activation":
        ntd = int(np.floor(rows * cols * p))
        ntdpr = int(np.floor(cols * p))
        nz = 0
        for i in range(rows):
            if nz < ntd:
                sa = np.argsort(x[i])
                for j in range(ntdpr):
                    if nz < ntd:
                        mask[i][sa[j]] = 0
                        nz += 1
    return (x * mask) * (1.0 / (1.0 - p))


if __name__ == "__main__":
    key = jax.random.PRNGKey(0)
    rows, cols, p = 16, 32, 0.5
    x = jax.random.normal(key, (rows, cols), dtype=jnp.float32)

    # Deterministic modes: check against the numpy reference port.
    for mode in ("row", "row_end", "max_activation", "alt_max_activation"):
        out = jax.block_until_ready(deterministic_dropout(x, mode, p))
        ref = _ref_dropout(np.asarray(x), mode, p)
        np.testing.assert_allclose(np.asarray(out), ref, rtol=1e-5, atol=1e-5)

    # Random / debug mode: Bernoulli mask from uint32 bits (not bit-identical
    # to np.random); sanity check shape, scaling, and ~p of entries zeroed.
    out_r = jax.block_until_ready(deterministic_dropout(x, "random", p, seed=1234))
    assert out_r.shape == x.shape
    zero_frac = float(np.mean(np.asarray(out_r) == 0.0))
    assert 0.2 < zero_frac < 0.8, zero_frac

    # Eval mode: identity.
    out_eval = jax.block_until_ready(
        deterministic_dropout(x, "row", p, training=False))
    np.testing.assert_allclose(np.asarray(out_eval), np.asarray(x))

    print("KERNEL_OK")
</pallas_src>

<mosaic_0001>
module attributes {stable_mosaic.version = 11 : i64} {
  func.func @_row_mask_kernel(%arg0: i32, %arg1: memref<16x32xf32, #tpu.memory_space<vmem>>, %arg2: memref<16x32xf32, #tpu.memory_space<vmem>>) attributes {dimension_semantics = [#tpu.dimension_semantics<parallel>], iteration_bounds = array<i64: 1>, scalar_prefetch = 0 : i64, scratch_operands = 0 : i64, tpu.core_type = #tpu.core_type<tc>, window_params = [{transform_indices = @transform_0, window_bounds = array<i64: 16, 32>}, {transform_indices = @transform_1, window_bounds = array<i64: 16, 32>}]} {
    %c16_i32 = arith.constant 16 : i32
    %0 = arith.muli %arg0, %c16_i32 : i32
    %c16_i32_0 = arith.constant 16 : i32
    %1 = arith.addi %0, %c16_i32_0 : i32
    %c8_i32 = arith.constant 8 : i32
    %2 = arith.cmpi sge, %0, %c8_i32 : i32
    %c8_i32_1 = arith.constant 8 : i32
    %3 = arith.cmpi sle, %1, %c8_i32_1 : i32
    %4 = arith.extui %2 : i1 to i32
    %c0_i32 = arith.constant 0 : i32
    %5 = arith.cmpi ne, %4, %c0_i32 : i32
    scf.if %5 {
      %c0 = arith.constant 0 : index
      %c0_4 = arith.constant 0 : index
      %12 = vector.load %arg1[%c0, %c0_4] : memref<16x32xf32, #tpu.memory_space<vmem>>, vector<16x32xf32>
      %cst = arith.constant 2.000000e+00 : f32
      %13 = vector.broadcast %cst : f32 to vector<16x32xf32>
      %14 = arith.mulf %12, %13 : vector<16x32xf32>
      %c0_5 = arith.constant 0 : index
      %c0_6 = arith.constant 0 : index
      %15 = vector.load %arg2[%c0_5, %c0_6] : memref<16x32xf32, #tpu.memory_space<vmem>>, vector<16x32xf32>
      tpu.vector_store %arg2[%c0_5, %c0_6], %14 {strides = array<i32>} : memref<16x32xf32, #tpu.memory_space<vmem>>, vector<16x32xf32>,
    } else {
    }
    %6 = arith.extui %3 : i1 to i32
    %c0_i32_2 = arith.constant 0 : i32
    %7 = arith.cmpi ne, %6, %c0_i32_2 : i32
    scf.if %7 {
      %cst = arith.constant 0.000000e+00 : f32
      %12 = vector.broadcast %cst : f32 to vector<16x32xf32>
      %c0 = arith.constant 0 : index
      %c0_4 = arith.constant 0 : index
      %13 = vector.load %arg2[%c0, %c0_4] : memref<16x32xf32, #tpu.memory_space<vmem>>, vector<16x32xf32>
      tpu.vector_store %arg2[%c0, %c0_4], %12 {strides = array<i32>} : memref<16x32xf32, #tpu.memory_space<vmem>>, vector<16x32xf32>,
    } else {
    }
    %8 = arith.ori %2, %3 : i1
    %true = arith.constant true
    %9 = arith.xori %8, %true : i1
    %10 = arith.extui %9 : i1 to i32
    %c0_i32_3 = arith.constant 0 : i32
    %11 = arith.cmpi ne, %10, %c0_i32_3 : i32
    scf.if %11 {
      %12 = tpu.iota {dimensions = array<i32: 0>} : vector<16x1xi32>
      %13 = vector.broadcast %0 : i32 to vector<16x1xi32>
      %14 = arith.addi %13, %12 : vector<16x1xi32>
      %c8_i32_4 = arith.constant 8 : i32
      %15 = vector.broadcast %c8_i32_4 : i32 to vector<16x1xi32>
      %16 = arith.cmpi sge, %14, %15 : vector<16x1xi32>
      %c0 = arith.constant 0 : index
      %c0_5 = arith.constant 0 : index
      %17 = vector.load %arg1[%c0, %c0_5] : memref<16x32xf32, #tpu.memory_space<vmem>>, vector<16x32xf32>
      %c0_i32_6 = arith.constant 0 : i32
      %18 = arith.sitofp %c0_i32_6 : i32 to f32
      %19 = vector.shape_cast %16 : vector<16x1xi1> to vector<16x1xi1>
      %20 = vector.broadcast %19 : vector<16x1xi1> to vector<16x32xi1>
      %21 = vector.broadcast %18 : f32 to vector<16x32xf32>
      %22 = arith.select %20, %17, %21 : vector<16x32xi1>, vector<16x32xf32>
      %cst = arith.constant 2.000000e+00 : f32
      %23 = vector.broadcast %cst : f32 to vector<16x32xf32>
      %24 = arith.mulf %22, %23 : vector<16x32xf32>
      %c0_7 = arith.constant 0 : index
      %c0_8 = arith.constant 0 : index
      %25 = vector.load %arg2[%c0_7, %c0_8] : memref<16x32xf32, #tpu.memory_space<vmem>>, vector<16x32xf32>
      tpu.vector_store %arg2[%c0_7, %c0_8], %24 {strides = array<i32>} : memref<16x32xf32, #tpu.memory_space<vmem>>, vector<16x32xf32>,
    } else {
    }
    return
  }
  func.func @transform_0(%arg0: i32) -> (i32, i32) {
    %c0_i32 = arith.constant 0 : i32
    %c0_i32_0 = arith.constant 0 : i32
    return %arg0, %c0_i32 : i32, i32
  }
  func.func @transform_1(%arg0: i32) -> (i32, i32) {
    %c0_i32 = arith.constant 0 : i32
    %c0_i32_0 = arith.constant 0 : i32
    return %arg0, %c0_i32 : i32, i32
  }
}

</mosaic_0001>

<llo_original>
// kernel: tpu_custom_call.1
$region0: #{tpu_custom_call.1}
  #allocation0 [shape = 'u32[]', space=smem, size = 0x4, offset = 0x4, fixed_abs, tag = 'smem constant byte address 0x4 - core index']
  #allocation1 [shape = 'u32[72,128]{1,0:T(1,128)}', space=vmem, size = 0x9000, scoped, tag = 'internal scratch']
  %s0 = inlined_call_operand.hbm [shape: f32[16,32], index: 0, kind: input, shape index: {}]
  %s1 = inlined_call_operand.hbm [shape: f32[16,32], index: 1, kind: output, shape index: {}]
  %s2 = sld [smem:[#allocation0]]
  $region30: #{tpu_custom_call.1} parent=0
    _
  %s4 = ssub.s32 1, %s2
  %s5 = scalar_select 0, %s4, %s2
  $region1: #{tpu_custom_call.1} parent=0
    #allocation2 [shape = 'u8[8192]{0}', space=vmem, size = 0x2000, scoped, tag = 'input window, operand 0, single buffered']
    #allocation3 [shape = 's32[1]{0}', space=sflag, size = 0x4, scoped, tag = 'scoped memory for tpu_custom_call.1']
    #allocation4 [shape = 's32[1]{0}', space=sflag, size = 0x4, scoped, tag = 'scoped memory for tpu_custom_call.1']
    #allocation5 [shape = 'u8[8192]{0}', space=vmem, size = 0x2000, scoped, tag = 'output window, operand 0, single buffered']
    %6 = vsyncpa [#allocation3], 0
    %7 = vsyncpa [#allocation4], 0
    // Predicated region
    $region2: #{tpu_custom_call.1} parent=1 // pred_check
      _
    $region3: #{tpu_custom_call.1} parent=1 // pred_check_branch
      %9 = sbr.rel (0) target = $region5
    $region4: #{tpu_custom_call.1} parent=1 // pred_region
      %11 = vsyncadd [#allocation3], 0
      %s12 = sshll.u32 %s0, 4
      %s13 = int_to_ptr.hbm [resolvable:$true] %s12
      %s14 = sshll.u32 [#allocation2], 4
      %s15 = int_to_ptr.vmem [resolvable:$true] %s14
      %20 = dma.hbm_to_vmem [thread:$0]  %s13, 256, %s15, [#allocation3], 128, 128, 8
    $region5: #{tpu_custom_call.1} parent=1 // pred_fallthru
      _
    // Predicated region
    $region6: #{tpu_custom_call.1} parent=1 // pred_check
      _
    $region7: #{tpu_custom_call.1} parent=1 // pred_check_branch
      %22 = sbr.rel (0) target = $region9
    $region8: #{tpu_custom_call.1} parent=1 // pred_region
      %24 = dma.done [#allocation3], 256
    $region9: #{tpu_custom_call.1} parent=1 // pred_fallthru
      _
    %s25 = smul.u32 0, 16
    %s26 = sadd.s32 %s25, 16
    %p27 = scmp.ge.s32.totalorder %s25, 8
    %p28 = scmp.le.s32.totalorder %s26, 8
    // Predicated region
    $region10: #{tpu_custom_call.1} parent=1 // pred_check
      %p29 = pneg %p27
    $region11: #{tpu_custom_call.1} parent=1 // pred_check_branch
      %31 = sbr.rel (%p29) target = $region13
    $region12: #{tpu_custom_call.1} parent=1 // pred_region
      %v32 = vld [vmem:[#allocation2] sm:$0xff]
      %v33 = vld [vmem:[#allocation2 + $0x8] sm:$0xff]
      %v34 = vmul.f32 %v32, 2.0
      %v35 = vmul.f32 %v33, 2.0
      %vm36 = vcmask 261120
      %37 = vst.msk [vmem:[#allocation5] sm:$0xff] %vm36, %v34
      %38 = vst.msk [vmem:[#allocation5 + $0x8] sm:$0xff] %vm36, %v35
    $region13: #{tpu_custom_call.1} parent=1 // pred_fallthru
      _
    // Predicated region
    $region14: #{tpu_custom_call.1} parent=1 // pred_check
      %p39 = pneg %p28
    $region15: #{tpu_custom_call.1} parent=1 // pred_check_branch
      %41 = sbr.rel (%p39) target = $region17
    $region16: #{tpu_custom_call.1} parent=1 // pred_region
      %vm42 = vcmask 261120
      %43 = vst.msk [vmem:[#allocation5] sm:$0xff] %vm42, 0.0
      %44 = vst.msk [vmem:[#allocation5 + $0x8] sm:$0xff] %vm42, 0.0
    $region17: #{tpu_custom_call.1} parent=1 // pred_fallthru
      _
    %p45 = por %p27, %p28
    %p46 = pneg %p45
    // Predicated region
    $region18: #{tpu_custom_call.1} parent=1 // pred_check
      _
    $region19: #{tpu_custom_call.1} parent=1 // pred_check_branch
      %48 = sbr.rel (%p45) target = $region21
    $region20: #{tpu_custom_call.1} parent=1 // pred_region
      %v49 = vlaneseq
      %v50 = vshrl.u32 %v49, 7
      %v51 = vadd.s32 %v50, 8
      %v52 = vstv %s25
      %v53 = vadd.s32 %v52, %v50
      %v54 = vadd.s32 %v52, %v51
      %vm55 = vcmp.ge.s32.totalorder %v53, 8
      %vm56 = vcmp.ge.s32.totalorder %v54, 8
      %v57 = vld [vmem:[#allocation2] sm:$0xff]
      %v58 = vld [vmem:[#allocation2 + $0x8] sm:$0xff]
      %v59 = vsel %vm55, 1, 0
      %v60 = vsel %vm56, 1, 0
      %vm61 = vcmp.eq.s32.totalorder %v59, 1
      %vm62 = vcmp.eq.s32.totalorder %v60, 1
      %v63 = vsel %vm61, %v57, 0.0
      %v64 = vsel %vm62, %v58, 0.0
      %v65 = vmul.f32 %v63, 2.0
      %v66 = vmul.f32 %v64, 2.0
      %vm67 = vcmask 261120
      %68 = vst.msk [vmem:[#allocation5] sm:$0xff] %vm67, %v65
      %69 = vst.msk [vmem:[#allocation5 + $0x8] sm:$0xff] %vm67, %v66
    $region21: #{tpu_custom_call.1} parent=1 // pred_fallthru
      _
    // Predicated region
    $region22: #{tpu_custom_call.1} parent=1 // pred_check
      _
    $region23: #{tpu_custom_call.1} parent=1 // pred_check_branch
      %71 = sbr.rel (0) target = $region25
    $region24: #{tpu_custom_call.1} parent=1 // pred_region
      %73 = vsyncadd [#allocation4], 0
      %s74 = sshll.u32 [#allocation5], 4
      %s75 = int_to_ptr.vmem [resolvable:$true] %s74
      %s76 = sshll.u32 %s1, 4
      %s77 = int_to_ptr.hbm [resolvable:$true] %s76
      %82 = dma.vmem_to_hbm [thread:$0]  %s75, 256, %s77, [#allocation4], 128, 128, 8
    $region25: #{tpu_custom_call.1} parent=1 // pred_fallthru
      _
    // Predicated region
    $region26: #{tpu_custom_call.1} parent=1 // pred_check
      _
    $region27: #{tpu_custom_call.1} parent=1 // pred_check_branch
      %84 = sbr.rel (0) target = $region29
    $region28: #{tpu_custom_call.1} parent=1 // pred_region
      %86 = dma.done [#allocation4], 256
    $region29: #{tpu_custom_call.1} parent=1 // pred_fallthru
      _
    %87 = vsyncpa [#allocation3], 1
    %88 = vsyncpa [#allocation4], 1

</llo_original>
